<compile_context>
chip_gen: v7x
topology: tpu7x:2x2x1
jax: 0.10.0
libtpu: 0.0.40
codegen_flags: <defaults>
</compile_context>

<pallas_src>
import math

import jax
import jax.numpy as jnp
from jax.experimental import pallas as pl
from jax.experimental.pallas import tpu as pltpu

_SQRT_2_OVER_PI = math.sqrt(2.0 / math.pi)


def _gelu_kernel(x_ref, o_ref):
    x = x_ref[...].astype(jnp.float32)
    inner = jnp.float32(_SQRT_2_OVER_PI) * (x + jnp.float32(0.044715) * x * x * x)
    y = jnp.float32(0.5) * x * (jnp.float32(1.0) + jnp.tanh(inner))
    o_ref[...] = y.astype(o_ref.dtype)


def _sublane_pack(dtype) -> int:
    itemsize = jnp.dtype(dtype).itemsize
    return {1: 32, 2: 16, 4: 8}.get(itemsize, 8)


def gelu_pallas(x, *, block_bytes=2 * 1024 * 1024):
    """Tanh-approx GELU (matches the PyTorch GELU module) over any shape."""
    orig_shape = x.shape
    dtype = x.dtype
    itemsize = jnp.dtype(dtype).itemsize
    pack = _sublane_pack(dtype)

    n = int(math.prod(orig_shape)) if orig_shape else 1
    if n == 0:
        return x

    # Pick a wide, lane-dense slab width (multiple of 128).  Prefer one that
    # divides the element count exactly so no pad / slice passes are needed.
    cn = None
    for cand in (2048, 1024, 512, 256, 128):
        if n % cand == 0:
            cn = cand
            break

    if cn is not None:
        x2 = x.reshape(-1, cn)
        n_pad = 0
    else:
        # Rare fallback (element count not a multiple of 128): pad only the
        # small tail of the flattened tensor.
        cn = 512 if n >= 512 else 128
        rows0 = -(-n // cn)
        n_pad = rows0 * cn - n
        x2 = jnp.pad(x.reshape(-1), (0, n_pad)).reshape(rows0, cn)

    rows = x2.shape[0]

    # Row tile: target ~block_bytes per block, rounded down to the dtype's
    # sublane pack.  If the whole slab fits in one target block, use the full
    # row extent (block dim == array dim is always a legal block shape).
    rows_per_block = max(1, block_bytes // (cn * itemsize))
    if rows_per_block >= rows:
        tr = rows
    else:
        tr = max(pack, (rows_per_block // pack) * pack)

    grid = (pl.cdiv(rows, tr),)

    cost = pl.CostEstimate(
        flops=8 * n,
        transcendentals=n,
        bytes_accessed=2 * n * itemsize,
    )

    out = pl.pallas_call(
        _gelu_kernel,
        out_shape=jax.ShapeDtypeStruct(x2.shape, dtype),
        grid_spec=pltpu.PrefetchScalarGridSpec(
            num_scalar_prefetch=0,
            grid=grid,
            in_specs=[pl.BlockSpec((tr, cn), lambda i: (i, 0))],
            out_specs=pl.BlockSpec((tr, cn), lambda i: (i, 0)),
        ),
        compiler_params=pltpu.CompilerParams(
            dimension_semantics=("parallel",),
        ),
        cost_estimate=cost,
    )(x2)

    if n_pad:
        out = out.reshape(-1)[:n]
    return out.reshape(orig_shape)


def gelu_reference(x):
    xf = x.astype(jnp.float32)
    c = jnp.float32(_SQRT_2_OVER_PI)
    y = 0.5 * xf * (1.0 + jnp.tanh(c * (xf + 0.044715 * xf ** 3)))
    return y.astype(x.dtype)


if __name__ == "__main__":
    key = jax.random.PRNGKey(0)
    k1, k2, k3 = jax.random.split(key, 3)

    # Typical small transformer activation shape (batch, seq, hidden).
    x1 = jax.random.normal(k1, (2, 8, 32), dtype=jnp.float32)
    y1 = jax.block_until_ready(gelu_pallas(x1))
    assert y1.shape == x1.shape and y1.dtype == x1.dtype
    assert jnp.allclose(y1, gelu_reference(x1), atol=1e-5, rtol=1e-5)

    # Multi-step grid with a ragged last row-block (exercises cdiv masking).
    x2 = jax.random.normal(k2, (40, 512), dtype=jnp.float32)
    y2 = jax.block_until_ready(gelu_pallas(x2, block_bytes=64 * 1024))
    assert jnp.allclose(y2, gelu_reference(x2), atol=1e-5, rtol=1e-5)

    # Odd element count -> small-tail padding fallback path.
    x3 = jax.random.normal(k3, (3, 5, 7), dtype=jnp.float32)
    y3 = jax.block_until_ready(gelu_pallas(x3))
    assert jnp.allclose(y3, gelu_reference(x3), atol=1e-5, rtol=1e-5)

    # bf16 path (sublane pack = 16, f32 internal math).
    x4 = jax.random.normal(k1, (4, 8, 128), dtype=jnp.bfloat16)
    y4 = jax.block_until_ready(gelu_pallas(x4))
    assert jnp.allclose(y4.astype(jnp.float32),
                        gelu_reference(x4).astype(jnp.float32),
                        atol=2e-2, rtol=2e-2)

    print("KERNEL_OK")
</pallas_src>

<mosaic_0001>
module attributes {stable_mosaic.version = 11 : i64} {
  func.func @_gelu_kernel(%arg0: i32, %arg1: memref<1x512xf32, #tpu.memory_space<vmem>>, %arg2: memref<1x512xf32, #tpu.memory_space<vmem>>) attributes {dimension_semantics = [#tpu.dimension_semantics<parallel>], iteration_bounds = array<i64: 1>, scalar_prefetch = 0 : i64, scratch_operands = 0 : i64, tpu.core_type = #tpu.core_type<tc>, window_params = [{transform_indices = @transform_0, window_bounds = array<i64: 1, 512>}, {transform_indices = @transform_1, window_bounds = array<i64: 1, 512>}]} {
    %c0 = arith.constant 0 : index
    %c0_0 = arith.constant 0 : index
    %0 = vector.load %arg1[%c0, %c0_0] : memref<1x512xf32, #tpu.memory_space<vmem>>, vector<1x512xf32>
    %cst = arith.constant 4.471500e-02 : f32
    %1 = vector.broadcast %cst : f32 to vector<1x512xf32>
    %2 = arith.mulf %1, %0 : vector<1x512xf32>
    %3 = arith.mulf %2, %0 : vector<1x512xf32>
    %4 = arith.mulf %3, %0 : vector<1x512xf32>
    %5 = arith.addf %0, %4 : vector<1x512xf32>
    %cst_1 = arith.constant 0.797884583 : f32
    %6 = vector.broadcast %cst_1 : f32 to vector<1x512xf32>
    %7 = arith.mulf %6, %5 : vector<1x512xf32>
    %cst_2 = arith.constant 5.000000e-01 : f32
    %8 = vector.broadcast %cst_2 : f32 to vector<1x512xf32>
    %9 = arith.mulf %8, %0 : vector<1x512xf32>
    %10 = math.tanh %7 : vector<1x512xf32>
    %cst_3 = arith.constant 1.000000e+00 : f32
    %11 = vector.broadcast %cst_3 : f32 to vector<1x512xf32>
    %12 = arith.addf %11, %10 : vector<1x512xf32>
    %13 = arith.mulf %9, %12 : vector<1x512xf32>
    %c0_4 = arith.constant 0 : index
    %c0_5 = arith.constant 0 : index
    %14 = vector.load %arg2[%c0_4, %c0_5] : memref<1x512xf32, #tpu.memory_space<vmem>>, vector<1x512xf32>
    tpu.vector_store %arg2[%c0_4, %c0_5], %13 {strides = array<i32>} : memref<1x512xf32, #tpu.memory_space<vmem>>, vector<1x512xf32>,
    return
  }
  func.func @transform_0(%arg0: i32) -> (i32, i32) {
    %c0_i32 = arith.constant 0 : i32
    %c0_i32_0 = arith.constant 0 : i32
    return %arg0, %c0_i32 : i32, i32
  }
  func.func @transform_1(%arg0: i32) -> (i32, i32) {
    %c0_i32 = arith.constant 0 : i32
    %c0_i32_0 = arith.constant 0 : i32
    return %arg0, %c0_i32 : i32, i32
  }
}

</mosaic_0001>

<llo_original>
// kernel: tpu_custom_call.1
$region0: #{tpu_custom_call.1}
  #allocation0 [shape = 'u32[]', space=smem, size = 0x4, offset = 0x4, fixed_abs, tag = 'smem constant byte address 0x4 - core index']
  #allocation1 [shape = 'u32[144,128]{1,0:T(1,128)}', space=vmem, size = 0x12000, scoped, tag = 'internal scratch']
  %s0 = inlined_call_operand.hbm [shape: f32[1,512], index: 0, kind: input, shape index: {}]
  %s1 = inlined_call_operand.hbm [shape: f32[1,512], index: 1, kind: output, shape index: {}]
  %s2 = sld [smem:[#allocation0]]
  $region18: #{tpu_custom_call.1} parent=0
    _
  %s4 = ssub.s32 1, %s2
  %s5 = scalar_select 0, %s4, %s2
  $region1: #{tpu_custom_call.1} parent=0
    #allocation2 [shape = 'u8[2048]{0}', space=vmem, size = 0x800, scoped, tag = 'input window, operand 0, single buffered']
    #allocation3 [shape = 's32[1]{0}', space=sflag, size = 0x4, scoped, tag = 'scoped memory for tpu_custom_call.1']
    #allocation4 [shape = 's32[1]{0}', space=sflag, size = 0x4, scoped, tag = 'scoped memory for tpu_custom_call.1']
    #allocation5 [shape = 'u8[2048]{0}', space=vmem, size = 0x800, scoped, tag = 'output window, operand 0, single buffered']
    %6 = vsyncpa [#allocation3], 0
    %7 = vsyncpa [#allocation4], 0
    // Predicated region
    $region2: #{tpu_custom_call.1} parent=1 // pred_check
      _
    $region3: #{tpu_custom_call.1} parent=1 // pred_check_branch
      %9 = sbr.rel (0) target = $region5
    $region4: #{tpu_custom_call.1} parent=1 // pred_region
      %s11 = ssub.s32 64, 64
      %12 = vsyncadd [#allocation3], %s11
      %s14 = sshll.u32 [#allocation2], 4
      %s15 = int_to_ptr.vmem [resolvable:$true] %s14
      %17 = dma.hbm_to_vmem [thread:$0]  %s0, 64, %s15, [#allocation3]
    $region5: #{tpu_custom_call.1} parent=1 // pred_fallthru
      _
    // Predicated region
    $region6: #{tpu_custom_call.1} parent=1 // pred_check
      _
    $region7: #{tpu_custom_call.1} parent=1 // pred_check_branch
      %19 = sbr.rel (0) target = $region9
    $region8: #{tpu_custom_call.1} parent=1 // pred_region
      %20 = dma.done [#allocation3], 64
    $region9: #{tpu_custom_call.1} parent=1 // pred_fallthru
      _
    %v21 = vld [vmem:[#allocation2] sm:$0xf]
    %v22 = vmul.f32 %v21, 0.044715
    %v23 = vmul.f32 %v22, %v21
    %v24 = vmul.f32 %v23, %v21
    %v25 = vadd.f32 %v21, %v24
    %v26 = vmul.f32 %v25, 0.7978846
    %v27 = vmul.f32 %v21, 0.5
    %v28 = vtanh.pop %v26
    %v29 = vadd.f32 %v28, 1.0
    %v30 = vmul.f32 %v27, %v29
    %v31 = vlaneseq
    %vm32 = vcmp.ge.s32.totalorder %v31, 0
    %vm33 = vcmp.lt.s32.totalorder %v31, 512
    %vm34 = vmand %vm32, %vm33
    %35 = vst.msk [vmem:[#allocation5] sm:$0xf] %vm34, %v30
    // Predicated region
    $region10: #{tpu_custom_call.1} parent=1 // pred_check
      _
    $region11: #{tpu_custom_call.1} parent=1 // pred_check_branch
      %37 = sbr.rel (0) target = $region13
    $region12: #{tpu_custom_call.1} parent=1 // pred_region
      %s39 = ssub.s32 64, 64
      %40 = vsyncadd [#allocation4], %s39
      %s42 = sshll.u32 [#allocation5], 4
      %s43 = int_to_ptr.vmem [resolvable:$true] %s42
      %45 = dma.vmem_to_hbm [thread:$0]  %s43, 64, %s1, [#allocation4]
    $region13: #{tpu_custom_call.1} parent=1 // pred_fallthru
      _
    // Predicated region
    $region14: #{tpu_custom_call.1} parent=1 // pred_check
      _
    $region15: #{tpu_custom_call.1} parent=1 // pred_check_branch
      %47 = sbr.rel (0) target = $region17
    $region16: #{tpu_custom_call.1} parent=1 // pred_region
      %48 = dma.done [#allocation4], 64
    $region17: #{tpu_custom_call.1} parent=1 // pred_fallthru
      _
    %49 = vsyncpa [#allocation3], 1
    %50 = vsyncpa [#allocation4], 1

</llo_original>
